<compile_context>
chip_gen: v5e
topology: v5e:2x2
jax: 0.10.0
libtpu: 0.0.40
codegen_flags: <defaults>
</compile_context>

<pallas_src>
import functools

import jax
import jax.numpy as jnp
from jax.experimental import pallas as pl
from jax.experimental.pallas import tpu as pltpu


def _hwconfig_kernel(w_ref, b_ref, x_ref, o_ref, *, nb: int, w: int, with_gelu: bool):
    # w_ref: SMEM (2,)           conv weight (out=1, in=2, 1, 1) flattened
    # b_ref: SMEM (1,)           conv bias
    # x_ref: VMEM (1, 2, H, Nb*W) lane-dense slab: sample n lives in lanes [n*W,(n+1)*W)
    # o_ref: VMEM (1, H, Nb*W)
    x0 = x_ref[0, 0]  # (H, Nb*W), channel 0, all Nb samples side by side
    x1 = x_ref[0, 1]  # (H, Nb*W), channel 1

    if with_gelu:
        # torch.nn.functional.gelu default is exact (erf-based)
        x0 = jax.nn.gelu(x0, approximate=False)
        x1 = jax.nn.gelu(x1, approximate=False)

    # 1x1 conv, 2 -> 1 channels: elementwise weighted sum over the whole slab (VPU)
    y = w_ref[0] * x0 + w_ref[1] * x1 + b_ref[0]  # (H, Nb*W)

    # x_.matmul(x_): per-sample (H, W) @ (H, W) on the MXU. Each sample is a
    # static, disjoint lane strip of the slab, so no cross-sample contamination.
    zs = []
    for n in range(nb):
        yn = y[:, n * w:(n + 1) * w]  # (H, W)
        zs.append(jnp.dot(yn, yn, preferred_element_type=jnp.float32))
    z = zs[0] if nb == 1 else jnp.concatenate(zs, axis=-1)  # (H, Nb*W)

    o_ref[0] = z.astype(o_ref.dtype)


def model_forward(x, conv_w, conv_b, *, with_gelu: bool = False,
                  target_lanes: int = 256,
                  max_samples_per_step: int = 64,
                  vmem_block_budget_bytes: int = 8 * 1024 * 1024):
    """x: (N, 2, H, H); conv_w: (1, 2, 1, 1); conv_b: (1,). Returns (N, 1, H, H)."""
    N, C, H, W = x.shape
    assert C == 2 and H == W, "module requires 2 input channels and square spatial dims"

    out_dtype = x.dtype
    x = x.astype(jnp.float32)
    w_flat = conv_w.reshape(2).astype(jnp.float32)
    b_flat = conv_b.reshape(1).astype(jnp.float32)

    # ---- choose how many samples to fuse per grid step ----------------------
    #   * enough for a lane-dense trailing axis (Nb*W >= target_lanes) when N allows
    #   * capped by a per-step VMEM budget and a modest unroll bound
    nb_lane = pl.cdiv(target_lanes, W)
    per_sample_bytes = 12 * H * W * 4            # dbl-buffered in/out blocks + temps (rough)
    nb_vmem = max(1, vmem_block_budget_bytes // per_sample_bytes)
    Nb = max(1, min(N, nb_lane, nb_vmem, max_samples_per_step))
    G = pl.cdiv(N, Nb)
    Nb = pl.cdiv(N, G)                           # rebalance so grid steps are even
    Npad = G * Nb

    if Npad != N:
        # Padded samples are computed independently and discarded below, so the
        # conv bias in the pad region cannot contaminate real outputs.
        x = jnp.pad(x, ((0, Npad - N), (0, 0), (0, 0), (0, 0)))

    # Lane-dense input slab: (G, 2, H, Nb*W); slab[g, c, h, n*W + w] = x[g*Nb+n, c, h, w]
    x_slab = (x.reshape(G, Nb, 2, H, W)
                .transpose(0, 2, 3, 1, 4)
                .reshape(G, 2, H, Nb * W))

    kernel = functools.partial(_hwconfig_kernel, nb=Nb, w=W, with_gelu=with_gelu)

    cost = pl.CostEstimate(
        flops=int(N) * (2 * H * H * H + 4 * H * W),              # matmul + 1x1 conv
        transcendentals=(int(N) * 2 * H * W) if with_gelu else 0,
        bytes_accessed=int(N) * (2 * H * W + H * W) * 4 + 3 * 4,
    )

    out_slab = pl.pallas_call(
        kernel,
        out_shape=jax.ShapeDtypeStruct((G, H, Nb * W), jnp.float32),
        grid=(G,),
        in_specs=[
            pl.BlockSpec(memory_space=pltpu.MemorySpace.SMEM),   # conv weight (2,)
            pl.BlockSpec(memory_space=pltpu.MemorySpace.SMEM),   # conv bias (1,)
            pl.BlockSpec((1, 2, H, Nb * W), lambda g: (g, 0, 0, 0)),
        ],
        out_specs=pl.BlockSpec((1, H, Nb * W), lambda g: (g, 0, 0)),
        compiler_params=pltpu.CompilerParams(
            dimension_semantics=("parallel",),       # shards batch steps across TCs on v7x
            vmem_limit_bytes=32 * 1024 * 1024,       # above v5e's 16 MiB default, safe everywhere
        ),
        cost_estimate=cost,
    )(w_flat, b_flat, x_slab)

    # Unpack the lane-dense output slab back to NCHW (layout plumbing only).
    out = (out_slab.reshape(G, H, Nb, W)
                   .transpose(0, 2, 1, 3)
                   .reshape(Npad, H, W)[:N]
                   .reshape(N, 1, H, W))
    return out.astype(out_dtype)


def _reference(x, conv_w, conv_b, *, with_gelu: bool = False):
    if with_gelu:
        x = jax.nn.gelu(x, approximate=False)
    # 1x1 conv: (N,2,H,W) * (1,2,1,1) summed over channel axis, + bias
    y = jnp.einsum("nchw,oc->nohw", x, conv_w.reshape(1, 2)) + conv_b.reshape(1, 1, 1, 1)
    # batched matmul over the last two dims
    z = jnp.einsum("nohk,nokw->nohw", y, y)
    return z


if __name__ == "__main__":
    key = jax.random.PRNGKey(0)
    k_x1, k_x2, k_w, k_b = jax.random.split(key, 4)

    C = 2
    fan_in = C * 1 * 1
    bound = 1.0 / (fan_in ** 0.5)
    # Deterministic Conv2d(2, 1, 1) parameters (synthetic init, not a checkpoint).
    conv_w = jax.random.uniform(k_w, (1, 2, 1, 1), minval=-bound, maxval=bound,
                                dtype=jnp.float32)
    conv_b = jax.random.uniform(k_b, (1,), minval=-bound, maxval=bound,
                                dtype=jnp.float32)

    # Case 1: canonical small shape — whole batch fused into one lane-dense step.
    N1, H1 = 2, 16
    x1 = jax.random.normal(k_x1, (N1, C, H1, H1), dtype=jnp.float32)
    out1 = jax.block_until_ready(model_forward(x1, conv_w, conv_b, with_gelu=False))
    ref1 = _reference(x1, conv_w, conv_b, with_gelu=False)
    assert out1.shape == (N1, 1, H1, H1), out1.shape
    assert jnp.allclose(out1, ref1, atol=1e-4, rtol=1e-4), \
        float(jnp.max(jnp.abs(out1 - ref1)))

    # Case 2: larger batch — exercises multi-step grid (megacore-shardable) and
    # the batch-padding path.
    N2, H2 = 21, 16
    x2 = jax.random.normal(k_x2, (N2, C, H2, H2), dtype=jnp.float32)
    out2 = jax.block_until_ready(model_forward(x2, conv_w, conv_b, with_gelu=False))
    ref2 = _reference(x2, conv_w, conv_b, with_gelu=False)
    assert out2.shape == (N2, 1, H2, H2), out2.shape
    assert jnp.allclose(out2, ref2, atol=1e-4, rtol=1e-4), \
        float(jnp.max(jnp.abs(out2 - ref2)))

    print("KERNEL_OK")
</pallas_src>

<mosaic_0001>
module attributes {stable_mosaic.version = 11 : i64} {
  func.func @_hwconfig_kernel(%arg0: i32, %arg1: memref<2xf32, #tpu.memory_space<smem>>, %arg2: memref<1xf32, #tpu.memory_space<smem>>, %arg3: memref<1x2x16x32xf32, #tpu.memory_space<vmem>>, %arg4: memref<1x16x32xf32, #tpu.memory_space<vmem>>) attributes {dimension_semantics = [#tpu.dimension_semantics<parallel>], iteration_bounds = array<i64: 1>, scalar_prefetch = 0 : i64, scratch_operands = 0 : i64, tpu.core_type = #tpu.core_type<tc>, window_params = [{transform_indices = @transform_0, window_bounds = array<i64: 2>}, {transform_indices = @transform_1, window_bounds = array<i64: 1>}, {transform_indices = @transform_2, window_bounds = array<i64: 1, 2, 16, 32>}, {transform_indices = @transform_3, window_bounds = array<i64: 1, 16, 32>}]} {
    %c0 = arith.constant 0 : index
    %c0_0 = arith.constant 0 : index
    %c0_1 = arith.constant 0 : index
    %c0_2 = arith.constant 0 : index
    %0 = vector.load %arg3[%c0, %c0_0, %c0_1, %c0_2] : memref<1x2x16x32xf32, #tpu.memory_space<vmem>>, vector<1x1x16x32xf32>
    %1 = vector.shape_cast %0 : vector<1x1x16x32xf32> to vector<16x32xf32>
    %c0_3 = arith.constant 0 : index
    %c1 = arith.constant 1 : index
    %c0_4 = arith.constant 0 : index
    %c0_5 = arith.constant 0 : index
    %2 = vector.load %arg3[%c0_3, %c1, %c0_4, %c0_5] : memref<1x2x16x32xf32, #tpu.memory_space<vmem>>, vector<1x1x16x32xf32>
    %3 = vector.shape_cast %2 : vector<1x1x16x32xf32> to vector<16x32xf32>
    %c0_6 = arith.constant 0 : index
    %4 = memref.load %arg1[%c0_6] : memref<2xf32, #tpu.memory_space<smem>>
    %5 = vector.broadcast %4 : f32 to vector<16x32xf32>
    %6 = arith.mulf %5, %1 : vector<16x32xf32>
    %c1_7 = arith.constant 1 : index
    %7 = memref.load %arg1[%c1_7] : memref<2xf32, #tpu.memory_space<smem>>
    %8 = vector.broadcast %7 : f32 to vector<16x32xf32>
    %9 = arith.mulf %8, %3 : vector<16x32xf32>
    %10 = arith.addf %6, %9 : vector<16x32xf32>
    %c0_8 = arith.constant 0 : index
    %11 = memref.load %arg2[%c0_8] : memref<1xf32, #tpu.memory_space<smem>>
    %12 = vector.broadcast %11 : f32 to vector<16x32xf32>
    %13 = arith.addf %10, %12 : vector<16x32xf32>
    %14 = vector.extract_strided_slice %13 {offsets = [0, 0], sizes = [16, 16], strides = [1, 1]} : vector<16x32xf32> to vector<16x16xf32>
    %cst = arith.constant dense<0.000000e+00> : vector<16x16xf32>
    %15 = tpu.matmul %14, %14, %cst {dimension_numbers = #tpu.dot_dimension_numbers<[1], [0], [0], [1], [0, 0, 1, 1], [], []>} : vector<16x16xf32>, vector<16x16xf32>, vector<16x16xf32> -> vector<16x16xf32>
    %16 = vector.extract_strided_slice %13 {offsets = [0, 16], sizes = [16, 16], strides = [1, 1]} : vector<16x32xf32> to vector<16x16xf32>
    %cst_9 = arith.constant dense<0.000000e+00> : vector<16x16xf32>
    %17 = tpu.matmul %16, %16, %cst_9 {dimension_numbers = #tpu.dot_dimension_numbers<[1], [0], [0], [1], [0, 0, 1, 1], [], []>} : vector<16x16xf32>, vector<16x16xf32>, vector<16x16xf32> -> vector<16x16xf32>
    %18 = tpu.concatenate %15, %17 in 1 : vector<16x16xf32>, vector<16x16xf32> -> vector<16x32xf32>
    %c0_10 = arith.constant 0 : index
    %c0_11 = arith.constant 0 : index
    %c0_12 = arith.constant 0 : index
    %19 = vector.load %arg4[%c0_10, %c0_11, %c0_12] : memref<1x16x32xf32, #tpu.memory_space<vmem>>, vector<1x16x32xf32>
    %20 = vector.shape_cast %19 : vector<1x16x32xf32> to vector<16x32xf32>
    %21 = vector.shape_cast %18 : vector<16x32xf32> to vector<1x16x32xf32>
    tpu.vector_store %arg4[%c0_10, %c0_11, %c0_12], %21 {strides = array<i32>} : memref<1x16x32xf32, #tpu.memory_space<vmem>>, vector<1x16x32xf32>,
    return
  }
  func.func @transform_0(%arg0: i32) -> i32 {
    %c0_i32 = arith.constant 0 : i32
    %c0_i32_0 = arith.constant 0 : i32
    return %c0_i32 : i32
  }
  func.func @transform_1(%arg0: i32) -> i32 {
    %c0_i32 = arith.constant 0 : i32
    %c0_i32_0 = arith.constant 0 : i32
    return %c0_i32 : i32
  }
  func.func @transform_2(%arg0: i32) -> (i32, i32, i32, i32) {
    %c0_i32 = arith.constant 0 : i32
    %c0_i32_0 = arith.constant 0 : i32
    %c0_i32_1 = arith.constant 0 : i32
    %c0_i32_2 = arith.constant 0 : i32
    return %arg0, %c0_i32, %c0_i32_0, %c0_i32_1 : i32, i32, i32, i32
  }
  func.func @transform_3(%arg0: i32) -> (i32, i32, i32) {
    %c0_i32 = arith.constant 0 : i32
    %c0_i32_0 = arith.constant 0 : i32
    %c0_i32_1 = arith.constant 0 : i32
    return %arg0, %c0_i32, %c0_i32_0 : i32, i32, i32
  }
}

</mosaic_0001>

<llo_original>
// kernel: tpu_custom_call.1
$region0: #{tpu_custom_call.1}
  #allocation0 [shape = 'u32[]', space=smem, size = 0x4, offset = 0x4, fixed_abs, tag = 'smem constant byte address 0x4 - core index']
  #allocation1 [shape = 'u32[72,128]{1,0:T(1,128)}', space=vmem, size = 0x9000, scoped, tag = 'internal scratch']
  #allocation2 [shape = 'f32[1]{0:T(128)S(6)}', space=smem, size = 0x200, scoped, tag = 'scoped memory for tpu_custom_call.1']
  %s0 = inlined_call_operand.vmem [shape: f32[2], index: 0, kind: input, shape index: {}]
  %s1 = inlined_call_operand.<no memory space> [shape: f32[1], index: 1, kind: input, shape index: {}]
  %s2 = inlined_call_operand.hbm [shape: f32[1,2,16,32], index: 2, kind: input, shape index: {}]
  %s3 = inlined_call_operand.hbm [shape: f32[1,16,32], index: 3, kind: output, shape index: {}]
  %s4 = sld [smem:[#allocation0]]
  $region30: #{tpu_custom_call.1} parent=0
    _
  %s6 = ssub.s32 1, %s4
  %s7 = scalar_select 0, %s6, %s4
  %8 = sst [smem:[#allocation2]] %s1
  $region1: #{tpu_custom_call.1} parent=0
    #allocation3 [shape = 'u8[512]{0}', space=smem, size = 0x200, scoped, tag = 'input window, operand 0, single buffered']
    #allocation4 [shape = 's32[1]{0}', space=sflag, size = 0x4, scoped, tag = 'scoped memory for tpu_custom_call.1']
    #allocation5 [shape = 's32[1]{0}', space=sflag, size = 0x4, scoped, tag = 'scoped memory for tpu_custom_call.1']
    #allocation6 [shape = 's32[1]{0}', space=sflag, size = 0x4, scoped, tag = 'scoped memory for tpu_custom_call.1']
    #allocation7 [shape = 'u8[16384]{0}', space=vmem, size = 0x4000, scoped, tag = 'input window, operand 2, single buffered']
    #allocation8 [shape = 'u8[8192]{0}', space=vmem, size = 0x2000, scoped, tag = 'output window, operand 0, single buffered']
    %9 = vsyncpa [#allocation6], 0
    %10 = vsyncpa [#allocation4], 0
    %11 = vsyncpa [#allocation5], 0
    // Predicated region
    $region2: #{tpu_custom_call.1} parent=1 // pred_check
      _
    $region3: #{tpu_custom_call.1} parent=1 // pred_check_branch
      %13 = sbr.rel (0) target = $region5
    $region4: #{tpu_custom_call.1} parent=1 // pred_region
      %15 = vsyncadd [#allocation6], 0
      %s17 = sshll.u32 %s0, 4
      %s18 = int_to_ptr.vmem [resolvable:$true] %s17
      %20 = dma.vmem_to_smem %s18, 16, [#allocation3], [#allocation6]
    $region5: #{tpu_custom_call.1} parent=1 // pred_fallthru
      _
    // Predicated region
    $region6: #{tpu_custom_call.1} parent=1 // pred_check
      _
    $region7: #{tpu_custom_call.1} parent=1 // pred_check_branch
      %22 = sbr.rel (0) target = $region9
    $region8: #{tpu_custom_call.1} parent=1 // pred_region
      _
    $region9: #{tpu_custom_call.1} parent=1 // pred_fallthru
      _
    // Predicated region
    $region10: #{tpu_custom_call.1} parent=1 // pred_check
      _
    $region11: #{tpu_custom_call.1} parent=1 // pred_check_branch
      %24 = sbr.rel (0) target = $region13
    $region12: #{tpu_custom_call.1} parent=1 // pred_region
      %26 = vsyncadd [#allocation4], 0
      %s27 = sshll.u32 %s2, 4
      %s28 = int_to_ptr.hbm [resolvable:$true] %s27
      %s29 = sshll.u32 [#allocation7], 4
      %s30 = int_to_ptr.vmem [resolvable:$true] %s29
      %35 = dma.hbm_to_vmem [thread:$0]  %s28, 512, %s30, [#allocation4], 128, 128, 8
    $region13: #{tpu_custom_call.1} parent=1 // pred_fallthru
      _
    // Predicated region
    $region14: #{tpu_custom_call.1} parent=1 // pred_check
      _
    $region15: #{tpu_custom_call.1} parent=1 // pred_check_branch
      %37 = sbr.rel (0) target = $region17
    $region16: #{tpu_custom_call.1} parent=1 // pred_region
      %39 = dma.done [#allocation6], 16
    $region17: #{tpu_custom_call.1} parent=1 // pred_fallthru
      _
    // Predicated region
    $region18: #{tpu_custom_call.1} parent=1 // pred_check
      _
    $region19: #{tpu_custom_call.1} parent=1 // pred_check_branch
      %41 = sbr.rel (0) target = $region21
    $region20: #{tpu_custom_call.1} parent=1 // pred_region
      %43 = dma.done [#allocation4], 512
    $region21: #{tpu_custom_call.1} parent=1 // pred_fallthru
      _
    %44 = sfence
    %v45 = vld [vmem:[#allocation7] sm:$0xff]
    %v46 = vld [vmem:[#allocation7 + $0x8] sm:$0xff]
    %s47 = scalar_lea.vmem [#allocation7], 16
    %v48 = vld [vmem:[%s47] sm:$0xff]
    %v49 = vld [vmem:[%s47 + $0x8] sm:$0xff]
    %s50 = sld [smem:[#allocation3]]
    %v51 = vstv %s50
    %v52 = vmul.f32 %v51, %v45
    %v53 = vmul.f32 %v51, %v46
    %s54 = sld [smem:[#allocation3 + $0x1]]
    %v55 = vstv %s54
    %v56 = vmul.f32 %v55, %v48
    %v57 = vmul.f32 %v55, %v49
    %v58 = vadd.f32 %v52, %v56
    %v59 = vadd.f32 %v53, %v57
    %s60 = sld [smem:[#allocation2]]
    %v61 = vstv %s60
    %v62 = vadd.f32 %v58, %v61
    %v63 = vadd.f32 %v59, %v61
    %vm64 = vcmask 130048
    %v66 = vsel %vm64, %v62, 0
    %v69 = vsel %vm64, %v63, 0
    %71 = vmatpush.msra.mxu0 0.0
    %72 = vmatpush.msra.mxu0 0.0
    %73 = vmatpush.msra.mxu0 0.0
    %74 = vmatpush.msra.mxu0 0.0
    %75 = vmatpush.msra.mxu0 0.0
    %76 = vmatpush.msra.mxu0 0.0
    %77 = vmatpush.msra.mxu0 0.0
    %78 = vmatpush.msra.mxu0 0.0
    %79 = vmatpush.msra.mxu0 0.0
    %80 = vmatpush.msra.mxu0 0.0
    %81 = vmatpush.msra.mxu0 0.0
    %82 = vmatpush.msra.mxu0 0.0
    %83 = vmatpush.msra.mxu0 0.0
    %84 = vmatpush.msra.mxu0 0.0
    %85 = vmatpush.msra.mxu0 %v63
    %86 = vmatpush.msra.mxu0 %v62
    %87 = vmatmul.f32.gmra.mxu0 %v66
    %v88 = vpop.f32.mrf.mxu0
    %v89 = vadd.f32 0.0, %v88
    %90 = vmatmul.f32.gmra.mxu0 %v69
    %v91 = vpop.f32.mrf.mxu0
    %v92 = vadd.f32 0.0, %v91
    %93 = vdwg.mxu0
    %94 = vrot.lane.b32.xlu0 %v62, 112
    %v95 = vpop.permute.xlu0 %94
    %96 = vrot.lane.b32.xlu0 %v63, 112
    %v97 = vpop.permute.xlu0 %96
    %v100 = vsel %vm64, %v95, 0
    %v102 = vsel %vm64, %v97, 0
    %104 = vmatpush.msra.mxu0 0.0
    %105 = vmatpush.msra.mxu0 0.0
    %106 = vmatpush.msra.mxu0 0.0
    %107 = vmatpush.msra.mxu0 0.0
    %108 = vmatpush.msra.mxu0 0.0
    %109 = vmatpush.msra.mxu0 0.0
    %110 = vmatpush.msra.mxu0 0.0
    %111 = vmatpush.msra.mxu0 0.0
    %112 = vmatpush.msra.mxu0 0.0
    %113 = vmatpush.msra.mxu0 0.0
    %114 = vmatpush.msra.mxu0 0.0
    %115 = vmatpush.msra.mxu0 0.0
    %116 = vmatpush.msra.mxu0 0.0
    %117 = vmatpush.msra.mxu0 0.0
    %118 = vmatpush.msra.mxu0 %v97
    %119 = vmatpush.msra.mxu0 %v95
    %120 = vmatmul.f32.gmra.mxu0 %v100
    %v121 = vpop.f32.mrf.mxu0
    %v122 = vadd.f32 0.0, %v121
    %123 = vmatmul.f32.gmra.mxu0 %v102
    %v124 = vpop.f32.mrf.mxu0
    %v125 = vadd.f32 0.0, %v124
    %126 = vdwg.mxu0
    %129 = vrot.lane.b32.xlu0 %v122, 16
    %v130 = vpop.permute.xlu0 %129
    %131 = vrot.lane.b32.xlu0 %v125, 16
    %v132 = vpop.permute.xlu0 %131
    %v135 = vsel %vm64, %v89, %v130
    %v136 = vsel %vm64, %v92, %v132
    %vm137 = vcmask 261120
    %138 = vst.msk [vmem:[#allocation8] sm:$0xff] %vm137, %v135
    %139 = vst.msk [vmem:[#allocation8 + $0x8] sm:$0xff] %vm137, %v136
    // Predicated region
    $region22: #{tpu_custom_call.1} parent=1 // pred_check
      _
    $region23: #{tpu_custom_call.1} parent=1 // pred_check_branch
      %141 = sbr.rel (0) target = $region25
    $region24: #{tpu_custom_call.1} parent=1 // pred_region
      %143 = vsyncadd [#allocation5], 0
      %s144 = sshll.u32 [#allocation8], 4
      %s145 = int_to_ptr.vmem [resolvable:$true] %s144
      %s146 = sshll.u32 %s3, 4
      %s147 = int_to_ptr.hbm [resolvable:$true] %s146
      %152 = dma.vmem_to_hbm [thread:$0]  %s145, 256, %s147, [#allocation5], 128, 128, 8
    $region25: #{tpu_custom_call.1} parent=1 // pred_fallthru
      _
    // Predicated region
    $region26: #{tpu_custom_call.1} parent=1 // pred_check
      _
    $region27: #{tpu_custom_call.1} parent=1 // pred_check_branch
      %154 = sbr.rel (0) target = $region29
    $region28: #{tpu_custom_call.1} parent=1 // pred_region
      %156 = dma.done [#allocation5], 256
    $region29: #{tpu_custom_call.1} parent=1 // pred_fallthru
      _
    %157 = vsyncpa [#allocation4], 1
    %158 = vsyncpa [#allocation5], 1
    %159 = vsyncpa [#allocation6], 1

</llo_original>
